<compile_context>
chip_gen: v6e
topology: v6e:2x2x1
jax: 0.10.0
libtpu: 0.0.40
codegen_flags: <defaults>
</compile_context>

<pallas_src>
import functools

import jax
import jax.numpy as jnp
from jax.experimental import pallas as pl
from jax.experimental.pallas import tpu as pltpu

GAMMA_NEG = 4.0
GAMMA_POS = 1.0
CLIP = 0.05
EPS = 1e-8


def _round_up(a, b):
    return (a + b - 1) // b * b


def _pow_static(base, gamma):
    """base ** gamma with a *static* scalar exponent.

    Small non-negative integer exponents are expanded into multiplies
    (exponentiation by squaring) so no EUP exp/log is spent, and pow(0, 0)
    correctly yields 1 (matches torch.pow).
    """
    g = float(gamma)
    if g == 0.0:
        return jnp.ones_like(base)
    if g.is_integer() and 0 < g <= 16:
        n = int(g)
        result = None
        b = base
        while n:
            if n & 1:
                result = b if result is None else result * b
            n >>= 1
            if n:
                b = b * b
        return result
    return jnp.power(base, jnp.float32(g))


def _asl_kernel(x_ref, y_ref, out_ref, acc_ref, *, gamma_neg, gamma_pos,
                clip, eps, assume_binary, batch, tile_b, steps, need_mask):
    j = pl.program_id(1)  # reduction axis (last)

    @pl.when(j == 0)
    def _init():
        acc_ref[...] = jnp.zeros_like(acc_ref)

    x = x_ref[...].astype(jnp.float32)
    y = y_ref[...].astype(jnp.float32)

    # sigmoid probabilities
    xs_pos = jax.nn.sigmoid(x)
    xs_neg = 1.0 - xs_pos

    # asymmetric clipping (probability shifting) on the negative side
    if clip is not None and clip > 0:
        xs_neg = jnp.minimum(xs_neg + clip, 1.0)

    use_focal = (gamma_neg > 0) or (gamma_pos > 0)

    if assume_binary:
        # y is a 0/1 multi-label vector: one log instead of two, and the
        # focal weight is an integer power selected per side (no tensor pow).
        y_pos = y > 0.5
        sel = jnp.where(y_pos, xs_pos, xs_neg)
        loss = jnp.log(jnp.maximum(sel, eps))
        if use_focal:
            base = 1.0 - sel  # == 1 - pt for binary labels
            w_pos = _pow_static(base, gamma_pos)
            w_neg = _pow_static(base, gamma_neg)
            loss = loss * jnp.where(y_pos, w_pos, w_neg)
    else:
        # General (soft-label) path: faithful translation of the torch module.
        one_minus_y = 1.0 - y
        los_pos = y * jnp.log(jnp.maximum(xs_pos, eps))
        los_neg = one_minus_y * jnp.log(jnp.maximum(xs_neg, eps))
        loss = los_pos + los_neg
        if use_focal:
            pt = xs_pos * y + xs_neg * one_minus_y
            one_sided_gamma = gamma_pos * y + gamma_neg * one_minus_y
            loss = loss * jnp.power(1.0 - pt, one_sided_gamma)

    if need_mask:
        # Last (partial / overhanging) tile: zero rows past the logical batch.
        # B, tile_b, steps are static; the mask is ~2 VPU ops per vreg.
        row_off = (pl.program_id(0) * steps + j) * tile_b
        rows_valid = batch - row_off
        row_ids = jax.lax.broadcasted_iota(jnp.int32, loss.shape, 0)
        loss = jnp.where(row_ids < rows_valid, loss, 0.0)

    # Steady-state reduction stays on the VPU:
    #   1) fold groups of 8 rows (major-axis reduce = plain vreg adds),
    #   2) when C % 128 == 0, fold 128-lane groups with lane-aligned static
    #      slices (also plain vreg adds, no relayout) into an (8, 128) vreg.
    tb, c = loss.shape
    folded = jnp.sum(loss.reshape(tb // 8, 8, c), axis=0)  # (8, c)
    if c % 128 == 0:
        total = folded[:, 0:128]
        for g in range(1, c // 128):
            total = total + folded[:, g * 128:(g + 1) * 128]
        acc_ref[...] += total
    else:
        acc_ref[...] += folded

    # Single cross-lane reduction + scalar store only on the last step.
    @pl.when(j == pl.num_programs(1) - 1)
    def _final():
        out_ref[0, 0] = -jnp.sum(acc_ref[...])


def _tpu_vmem_capacity_bytes():
    try:
        return int(pltpu.get_tpu_info().vmem_capacity_bytes)
    except Exception:
        return 128 * 2**20  # v5e/v6e default


def asymmetric_loss(x, y, *, gamma_neg=GAMMA_NEG, gamma_pos=GAMMA_POS,
                    clip=CLIP, eps=EPS, assume_binary_labels=False,
                    tile_b=None, n_split=None):
    """Asymmetric multi-label loss; returns a float32 scalar.

    x may be f32/bf16 logits; y may be f32/bf16/int8/bool labels (the kernel
    upcasts to f32).  assume_binary_labels=True enables a faster path that is
    only valid for hard 0/1 labels.
    """
    B, C = x.shape
    assert y.shape == (B, C), (x.shape, y.shape)

    vmem_cap = _tpu_vmem_capacity_bytes()
    small_vmem = vmem_cap <= 80 * 2**20  # v7x-like: 64 MiB per TC, 2 TCs

    if n_split is None:
        # Only multi-TC chips benefit from the leading split; on single-TC
        # chips it just shrinks the tile and adds grid-step overhead.
        n_split = 2 if small_vmem else 1

    # Sublane alignment for the batch tile (8 for f32, 16 for bf16, 32 for i8)
    # so narrow input dtypes can be streamed and cast inside the kernel.
    sub = max(32 // x.dtype.itemsize, 32 // y.dtype.itemsize, 8)

    if tile_b is None:
        # VMEM budget for the streamed inputs (2 pipeline buffers of both
        # inputs): generous on 128 MiB chips, conservative on 64 MiB chips.
        budget = (24 if small_vmem else 44) * 2**20
        bytes_per_row = 2 * C * (x.dtype.itemsize + y.dtype.itemsize)
        budget_rows = max(sub, budget // max(bytes_per_row, 1))
        tile_b = min(1024, budget_rows, _round_up(pl.cdiv(B, n_split), sub))
    tile_b = max(sub, (tile_b // sub) * sub)

    nblocks = pl.cdiv(B, tile_b)
    steps = pl.cdiv(nblocks, n_split)
    # Clamp block indices that would fall entirely past the array (possible
    # when nblocks doesn't divide by n_split); those steps re-read the last
    # block and are fully zeroed by the in-kernel row mask.
    need_clamp = n_split * steps > nblocks
    need_mask = n_split * steps * tile_b != B

    acc_shape = (8, 128) if C % 128 == 0 else (8, C)

    def in_index_map(c, j):
        b = c * steps + j
        if need_clamp:
            b = jnp.minimum(b, nblocks - 1)
        return (b, 0)

    kernel = functools.partial(
        _asl_kernel, gamma_neg=gamma_neg, gamma_pos=gamma_pos,
        clip=clip, eps=eps, assume_binary=assume_binary_labels,
        batch=B, tile_b=tile_b, steps=steps, need_mask=need_mask)

    item_bytes = x.dtype.itemsize + y.dtype.itemsize
    # Real streamed footprint: 2 pipeline buffers x (x tile + y tile) + acc.
    vmem_need = 2 * tile_b * C * item_bytes + acc_shape[0] * max(acc_shape[1], 128) * 4
    vmem_cap_limit = min(vmem_cap * 5 // 8, 80 * 2**20)
    vmem_limit = int(min(max(vmem_need * 3 // 2, 16 * 2**20), vmem_cap_limit))

    cost = pl.CostEstimate(
        flops=20 * B * C,
        transcendentals=3 * B * C,
        bytes_accessed=B * C * item_bytes + n_split * 4,
    )

    partials = pl.pallas_call(
        kernel,
        out_shape=jax.ShapeDtypeStruct((n_split, 1), jnp.float32),
        grid_spec=pltpu.PrefetchScalarGridSpec(
            num_scalar_prefetch=0,
            grid=(n_split, steps),
            in_specs=[
                pl.BlockSpec((tile_b, C), in_index_map),
                pl.BlockSpec((tile_b, C), in_index_map),
            ],
            out_specs=pl.BlockSpec((1, 1), lambda c, j: (c, 0),
                                   memory_space=pltpu.SMEM),
            scratch_shapes=[pltpu.VMEM(acc_shape, jnp.float32)],
        ),
        compiler_params=pltpu.CompilerParams(
            # Leading axis is megacore-parallel (2 TCs on v7x each own a
            # partial); trailing reduction axis stays serial per core.
            dimension_semantics=("parallel", "arbitrary"),
            vmem_limit_bytes=vmem_limit,
        ),
        cost_estimate=cost,
    )(x, y)

    return jnp.sum(partials)


def _reference(x, y, gamma_neg=GAMMA_NEG, gamma_pos=GAMMA_POS,
               clip=CLIP, eps=EPS):
    """Faithful jnp translation of the PyTorch AsymmetricLoss.forward."""
    x = x.astype(jnp.float32)
    y = y.astype(jnp.float32)
    xs_pos = jax.nn.sigmoid(x)
    xs_neg = 1.0 - xs_pos
    if clip is not None and clip > 0:
        xs_neg = jnp.minimum(xs_neg + clip, 1.0)
    los_pos = y * jnp.log(jnp.maximum(xs_pos, eps))
    los_neg = (1.0 - y) * jnp.log(jnp.maximum(xs_neg, eps))
    loss = los_pos + los_neg
    if gamma_neg > 0 or gamma_pos > 0:
        pt = xs_pos * y + xs_neg * (1.0 - y)
        gam = gamma_pos * y + gamma_neg * (1.0 - y)
        loss = loss * jnp.power(1.0 - pt, gam)
    return -jnp.sum(loss)


if __name__ == "__main__":
    key = jax.random.PRNGKey(0)
    kx1, ky1, kx2, ky2 = jax.random.split(key, 4)

    # Case 1: small multi-label problem, f32 logits, binary f32 labels.
    B1, C1 = 16, 128
    x1 = jax.random.normal(kx1, (B1, C1), dtype=jnp.float32)
    y1 = (jax.random.uniform(ky1, (B1, C1)) < 0.3).astype(jnp.float32)

    out_general = jax.block_until_ready(asymmetric_loss(x1, y1))
    out_binary = jax.block_until_ready(
        asymmetric_loss(x1, y1, assume_binary_labels=True))
    ref1 = _reference(x1, y1)
    assert jnp.allclose(out_general, ref1, rtol=1e-4, atol=1e-4), (out_general, ref1)
    assert jnp.allclose(out_binary, ref1, rtol=1e-4, atol=1e-4), (out_binary, ref1)

    # Case 2: ragged batch (in-kernel masked partial tile), class count that is
    # not a lane multiple, and narrow streamed dtypes (bf16 logits, int8 labels).
    B2, C2 = 10, 96
    x2 = jax.random.normal(kx2, (B2, C2), dtype=jnp.float32).astype(jnp.bfloat16)
    y2 = (jax.random.uniform(ky2, (B2, C2)) < 0.3)

    out2 = jax.block_until_ready(
        asymmetric_loss(x2, y2.astype(jnp.int8), assume_binary_labels=True))
    ref2 = _reference(x2, y2.astype(jnp.float32))
    assert jnp.allclose(out2, ref2, rtol=1e-3, atol=1e-3), (out2, ref2)

    print("KERNEL_OK")
</pallas_src>

<mosaic_0001>
module attributes {stable_mosaic.version = 11 : i64} {
  func.func @_asl_kernel(%arg0: i32, %arg1: i32, %arg2: memref<16x128xf32, #tpu.memory_space<vmem>>, %arg3: memref<16x128xf32, #tpu.memory_space<vmem>>, %arg4: memref<1x1xf32, #tpu.memory_space<smem>>, %arg5: memref<8x128xf32, #tpu.memory_space<vmem>>) attributes {dimension_semantics = [#tpu.dimension_semantics<parallel>, #tpu.dimension_semantics<arbitrary>], iteration_bounds = array<i64: 1, 1>, scalar_prefetch = 0 : i64, scratch_operands = 1 : i64, tpu.core_type = #tpu.core_type<tc>, window_params = [{transform_indices = @transform_0, window_bounds = array<i64: 16, 128>}, {transform_indices = @transform_1, window_bounds = array<i64: 16, 128>}, {transform_indices = @transform_2, window_bounds = array<i64: 1, 1>}]} {
    %c0_i32 = arith.constant 0 : i32
    %0 = arith.cmpi eq, %arg1, %c0_i32 : i32
    %1 = arith.extui %0 : i1 to i32
    %c0_i32_0 = arith.constant 0 : i32
    %2 = arith.cmpi ne, %1, %c0_i32_0 : i32
    scf.if %2 {
      %cst_20 = arith.constant 0.000000e+00 : f32
      %47 = vector.broadcast %cst_20 : f32 to vector<8x128xf32>
      %c0_21 = arith.constant 0 : index
      %c0_22 = arith.constant 0 : index
      %48 = vector.load %arg5[%c0_21, %c0_22] : memref<8x128xf32, #tpu.memory_space<vmem>>, vector<8x128xf32>
      tpu.vector_store %arg5[%c0_21, %c0_22], %47 {strides = array<i32>} : memref<8x128xf32, #tpu.memory_space<vmem>>, vector<8x128xf32>,
    } else {
    }
    %c0 = arith.constant 0 : index
    %c0_1 = arith.constant 0 : index
    %3 = vector.load %arg2[%c0, %c0_1] : memref<16x128xf32, #tpu.memory_space<vmem>>, vector<16x128xf32>
    %c0_2 = arith.constant 0 : index
    %c0_3 = arith.constant 0 : index
    %4 = vector.load %arg3[%c0_2, %c0_3] : memref<16x128xf32, #tpu.memory_space<vmem>>, vector<16x128xf32>
    %5 = arith.negf %3 : vector<16x128xf32>
    %6 = math.exp %5 : vector<16x128xf32>
    %cst = arith.constant 1.000000e+00 : f32
    %7 = vector.broadcast %cst : f32 to vector<16x128xf32>
    %8 = arith.addf %7, %6 : vector<16x128xf32>
    %9 = arith.divf %7, %8 : vector<16x128xf32>
    %cst_4 = arith.constant 1.000000e+00 : f32
    %10 = vector.broadcast %cst_4 : f32 to vector<16x128xf32>
    %11 = arith.subf %10, %9 : vector<16x128xf32>
    %cst_5 = arith.constant 5.000000e-02 : f32
    %12 = vector.broadcast %cst_5 : f32 to vector<16x128xf32>
    %13 = arith.addf %11, %12 : vector<16x128xf32>
    %cst_6 = arith.constant 1.000000e+00 : f32
    %14 = vector.broadcast %cst_6 : f32 to vector<16x128xf32>
    %15 = arith.minimumf %13, %14 : vector<16x128xf32>
    %cst_7 = arith.constant 1.000000e+00 : f32
    %16 = vector.broadcast %cst_7 : f32 to vector<16x128xf32>
    %17 = arith.subf %16, %4 : vector<16x128xf32>
    %cst_8 = arith.constant 9.99999993E-9 : f32
    %18 = vector.broadcast %cst_8 : f32 to vector<16x128xf32>
    %19 = arith.maximumf %9, %18 : vector<16x128xf32>
    %20 = math.log %19 : vector<16x128xf32>
    %21 = arith.mulf %4, %20 : vector<16x128xf32>
    %cst_9 = arith.constant 9.99999993E-9 : f32
    %22 = vector.broadcast %cst_9 : f32 to vector<16x128xf32>
    %23 = arith.maximumf %15, %22 : vector<16x128xf32>
    %24 = math.log %23 : vector<16x128xf32>
    %25 = arith.mulf %17, %24 : vector<16x128xf32>
    %26 = arith.addf %21, %25 : vector<16x128xf32>
    %27 = arith.mulf %9, %4 : vector<16x128xf32>
    %28 = arith.mulf %15, %17 : vector<16x128xf32>
    %29 = arith.addf %27, %28 : vector<16x128xf32>
    %cst_10 = arith.constant 1.000000e+00 : f32
    %30 = vector.broadcast %cst_10 : f32 to vector<16x128xf32>
    %31 = arith.mulf %30, %4 : vector<16x128xf32>
    %cst_11 = arith.constant 4.000000e+00 : f32
    %32 = vector.broadcast %cst_11 : f32 to vector<16x128xf32>
    %33 = arith.mulf %32, %17 : vector<16x128xf32>
    %34 = arith.addf %31, %33 : vector<16x128xf32>
    %cst_12 = arith.constant 1.000000e+00 : f32
    %35 = vector.broadcast %cst_12 : f32 to vector<16x128xf32>
    %36 = arith.subf %35, %29 : vector<16x128xf32>
    %37 = math.powf %36, %34 : vector<16x128xf32>
    %38 = arith.mulf %26, %37 : vector<16x128xf32>
    %39 = vector.shape_cast %38 : vector<16x128xf32> to vector<2x8x128xf32>
    %cst_13 = arith.constant dense<0.000000e+00> : vector<8x128xf32>
    %40 = vector.multi_reduction <add>, %39, %cst_13 [0] : vector<2x8x128xf32> to vector<8x128xf32>
    %c0_14 = arith.constant 0 : index
    %c0_15 = arith.constant 0 : index
    %41 = vector.load %arg5[%c0_14, %c0_15] : memref<8x128xf32, #tpu.memory_space<vmem>>, vector<8x128xf32>
    %42 = arith.addf %41, %40 : vector<8x128xf32>
    %c0_16 = arith.constant 0 : index
    %c0_17 = arith.constant 0 : index
    %43 = vector.load %arg5[%c0_16, %c0_17] : memref<8x128xf32, #tpu.memory_space<vmem>>, vector<8x128xf32>
    tpu.vector_store %arg5[%c0_16, %c0_17], %42 {strides = array<i32>} : memref<8x128xf32, #tpu.memory_space<vmem>>, vector<8x128xf32>,
    %c0_i32_18 = arith.constant 0 : i32
    %44 = arith.cmpi eq, %arg1, %c0_i32_18 : i32
    %45 = arith.extui %44 : i1 to i32
    %c0_i32_19 = arith.constant 0 : i32
    %46 = arith.cmpi ne, %45, %c0_i32_19 : i32
    scf.if %46 {
      %c0_20 = arith.constant 0 : index
      %c0_21 = arith.constant 0 : index
      %47 = vector.load %arg5[%c0_20, %c0_21] : memref<8x128xf32, #tpu.memory_space<vmem>>, vector<8x128xf32>
      %48 = vector.shape_cast %47 : vector<8x128xf32> to vector<1x8x128xf32>
      %cst_22 = arith.constant dense<0.000000e+00> : vector<1xf32>
      %49 = vector.multi_reduction <add>, %48, %cst_22 [1, 2] : vector<1x8x128xf32> to vector<1xf32>
      %50 = vector.shape_cast %49 : vector<1xf32> to vector<1x1x1xf32>
      %51 = vector.extract %50[0, 0, 0] : f32 from vector<1x1x1xf32>
      %cst_23 = arith.constant 0.000000e+00 : f32
      %52 = arith.subf %cst_23, %51 : f32
      %c0_24 = arith.constant 0 : index
      %c0_25 = arith.constant 0 : index
      %53 = memref.load %arg4[%c0_24, %c0_25] : memref<1x1xf32, #tpu.memory_space<smem>>
      memref.store %52, %arg4[%c0_24, %c0_25] : memref<1x1xf32, #tpu.memory_space<smem>>
    } else {
    }
    return
  }
  func.func @transform_0(%arg0: i32, %arg1: i32) -> (i32, i32) {
    %c1_i32 = arith.constant 1 : i32
    %0 = arith.muli %arg0, %c1_i32 : i32
    %1 = arith.addi %0, %arg1 : i32
    %c0_i32 = arith.constant 0 : i32
    %c0_i32_0 = arith.constant 0 : i32
    return %1, %c0_i32 : i32, i32
  }
  func.func @transform_1(%arg0: i32, %arg1: i32) -> (i32, i32) {
    %c1_i32 = arith.constant 1 : i32
    %0 = arith.muli %arg0, %c1_i32 : i32
    %1 = arith.addi %0, %arg1 : i32
    %c0_i32 = arith.constant 0 : i32
    %c0_i32_0 = arith.constant 0 : i32
    return %1, %c0_i32 : i32, i32
  }
  func.func @transform_2(%arg0: i32, %arg1: i32) -> (i32, i32) {
    %c0_i32 = arith.constant 0 : i32
    %c0_i32_0 = arith.constant 0 : i32
    return %arg0, %c0_i32 : i32, i32
  }
}

</mosaic_0001>

<llo_original>
// kernel: tpu_custom_call.1
$region0: #{tpu_custom_call.1}
  #allocation0 [shape = 'u32[]', space=smem, size = 0x4, offset = 0x4, fixed_abs, tag = 'smem constant byte address 0x4 - core index']
  #allocation1 [shape = 'u32[144,128]{1,0:T(1,128)}', space=vmem, size = 0x12000, scoped, tag = 'internal scratch']
  #allocation2 [shape = 'f32[8,128]{1,0:T(8,128)}', space=vmem, size = 0x1000, scoped, tag = 'scratch operand']
  %s0 = inlined_call_operand.hbm [shape: f32[16,128], index: 0, kind: input, shape index: {}]
  %s1 = inlined_call_operand.hbm [shape: f32[16,128], index: 1, kind: input, shape index: {}]
  %s2 = inlined_call_operand.hbm [shape: f32[1,1], index: 2, kind: output, shape index: {}]
  %s3 = sld [smem:[#allocation0]]
  $region34: #{tpu_custom_call.1} parent=0
    _
  %s5 = ssub.s32 1, %s3
  %s6 = scalar_select 0, %s5, %s3
  $region1: #{tpu_custom_call.1} parent=0
    #allocation3 [shape = 'u8[8192]{0}', space=vmem, size = 0x2000, scoped, tag = 'input window, operand 0, single buffered']
    #allocation4 [shape = 's32[1]{0}', space=sflag, size = 0x4, scoped, tag = 'scoped memory for tpu_custom_call.1']
    #allocation5 [shape = 's32[1]{0}', space=sflag, size = 0x4, scoped, tag = 'scoped memory for tpu_custom_call.1']
    #allocation6 [shape = 'u8[8192]{0}', space=vmem, size = 0x2000, scoped, tag = 'input window, operand 1, single buffered']
    #allocation7 [shape = 's32[1]{0}', space=sflag, size = 0x4, scoped, tag = 'scoped memory for tpu_custom_call.1']
    #allocation8 [shape = 'u8[512]{0}', space=smem, size = 0x200, scoped, tag = 'output window, operand 0, single buffered']
    %7 = vsyncpa [#allocation4], 0
    %8 = vsyncpa [#allocation7], 0
    %9 = vsyncpa [#allocation5], 0
    // Predicated region
    $region2: #{tpu_custom_call.1} parent=1 // pred_check
      _
    $region3: #{tpu_custom_call.1} parent=1 // pred_check_branch
      %11 = sbr.rel (0) target = $region5
    $region4: #{tpu_custom_call.1} parent=1 // pred_region
      %s12 = sadd.s32 0, 0
      %s13 = smul.u32 2, %s12
      %s15 = ssub.s32 256, 256
      %16 = vsyncadd [#allocation4], %s15
      %s17 = smul.addr %s13, 128
      %s18 = scalar_lea.hbm %s0, %s17
      %s19 = sshll.u32 [#allocation3], 4
      %s20 = int_to_ptr.vmem [resolvable:$true] %s19
      %25 = dma.hbm_to_vmem [thread:$0]  %s18, 256, %s20, [#allocation4], 128, 128, 8
    $region5: #{tpu_custom_call.1} parent=1 // pred_fallthru
      _
    // Predicated region
    $region6: #{tpu_custom_call.1} parent=1 // pred_check
      _
    $region7: #{tpu_custom_call.1} parent=1 // pred_check_branch
      %27 = sbr.rel (0) target = $region9
    $region8: #{tpu_custom_call.1} parent=1 // pred_region
      %s28 = sadd.s32 0, 0
      %s29 = smul.u32 2, %s28
      %s31 = ssub.s32 256, 256
      %32 = vsyncadd [#allocation7], %s31
      %s33 = smul.addr %s29, 128
      %s34 = scalar_lea.hbm %s1, %s33
      %s35 = sshll.u32 [#allocation6], 4
      %s36 = int_to_ptr.vmem [resolvable:$true] %s35
      %41 = dma.hbm_to_vmem [thread:$0]  %s34, 256, %s36, [#allocation7], 128, 128, 8
    $region9: #{tpu_custom_call.1} parent=1 // pred_fallthru
      _
    // Predicated region
    $region10: #{tpu_custom_call.1} parent=1 // pred_check
      _
    $region11: #{tpu_custom_call.1} parent=1 // pred_check_branch
      %43 = sbr.rel (0) target = $region13
    $region12: #{tpu_custom_call.1} parent=1 // pred_region
      %44 = dma.done [#allocation4], 256
    $region13: #{tpu_custom_call.1} parent=1 // pred_fallthru
      _
    // Predicated region
    $region14: #{tpu_custom_call.1} parent=1 // pred_check
      _
    $region15: #{tpu_custom_call.1} parent=1 // pred_check_branch
      %46 = sbr.rel (0) target = $region17
    $region16: #{tpu_custom_call.1} parent=1 // pred_region
      %47 = dma.done [#allocation7], 256
    $region17: #{tpu_custom_call.1} parent=1 // pred_fallthru
      _
    %s48 = sadd.s32 0, 0
    %s49 = smul.u32 2, %s48
    %s50 = sadd.s32 0, 0
    %s51 = smul.u32 2, %s50
    %p52 = scmp.eq.s32.totalorder 0, 0
    // Predicated region
    $region18: #{tpu_custom_call.1} parent=1 // pred_check
      %p53 = pneg %p52
    $region19: #{tpu_custom_call.1} parent=1 // pred_check_branch
      %55 = sbr.rel (%p53) target = $region21
    $region20: #{tpu_custom_call.1} parent=1 // pred_region
      %56 = vst [vmem:[#allocation2] sm:$0xff] 0.0
    $region21: #{tpu_custom_call.1} parent=1 // pred_fallthru
      _
    %v57 = vld [vmem:[#allocation3] sm:$0xff]
    %v58 = vld [vmem:[#allocation3 + $0x8] sm:$0xff]
    %v59 = vld [vmem:[#allocation6] sm:$0xff]
    %v60 = vld [vmem:[#allocation6 + $0x8] sm:$0xff]
    %v61 = vxor.u32 %v57, 2147483648
    %v62 = vxor.u32 %v58, 2147483648
    %v63 = vmul.f32 %v61, 1.442695
    %v64 = vpow.pop %v63
    %v65 = vmul.f32 %v62, 1.442695
    %v66 = vpow.pop %v65
    %v67 = vadd.f32 %v64, 1.0
    %v68 = vadd.f32 %v66, 1.0
    %v69 = vrcp.pop %v67
    %v70 = vmul.f32 1.0, %v69
    %v71 = vrcp.pop %v68
    %v72 = vmul.f32 1.0, %v71
    %v73 = vsub.f32 1.0, %v70
    %v74 = vsub.f32 1.0, %v72
    %v75 = vadd.f32 %v73, 0.05
    %v76 = vadd.f32 %v74, 0.05
    %v77 = vmin.f32 %v75, 1.0
    %v78 = vmin.f32 %v76, 1.0
    %v79 = vsub.f32 1.0, %v59
    %v80 = vsub.f32 1.0, %v60
    %v81 = vmax.f32 %v70, 1e-08
    %v82 = vmax.f32 %v72, 1e-08
    %v83 = vlog2.pop %v81
    %v84 = vmul.f32 %v83, 0.6931472
    %v85 = vlog2.pop %v82
    %v86 = vmul.f32 %v85, 0.6931472
    %v87 = vmul.f32 %v59, %v84
    %v88 = vmul.f32 %v60, %v86
    %v89 = vmax.f32 %v77, 1e-08
    %v90 = vmax.f32 %v78, 1e-08
    %v91 = vlog2.pop %v89
    %v92 = vmul.f32 %v91, 0.6931472
    %v93 = vlog2.pop %v90
    %v94 = vmul.f32 %v93, 0.6931472
    %v95 = vmul.f32 %v79, %v92
    %v96 = vmul.f32 %v80, %v94
    %v97 = vadd.f32 %v87, %v95
    %v98 = vadd.f32 %v88, %v96
    %v99 = vmul.f32 %v70, %v59
    %v100 = vmul.f32 %v72, %v60
    %v101 = vmul.f32 %v77, %v79
    %v102 = vmul.f32 %v78, %v80
    %v103 = vadd.f32 %v99, %v101
    %v104 = vadd.f32 %v100, %v102
    %v105 = vmul.f32 %v79, 4.0
    %v106 = vmul.f32 %v80, 4.0
    %v107 = vadd.f32 %v59, %v105
    %v108 = vadd.f32 %v60, %v106
    %v109 = vsub.f32 1.0, %v103
    %v110 = vsub.f32 1.0, %v104
    %v111 = vpow.f32 %v109, %v107
    %v112 = vpow.f32 %v110, %v108
    %v113 = vmul.f32 %v97, %v111
    %v114 = vmul.f32 %v98, %v112
    %v115 = vadd.f32 %v113, %v114
    %v116 = vld [vmem:[#allocation2] sm:$0xff]
    %v117 = vadd.f32 %v116, %v115
    %118 = vst [vmem:[#allocation2] sm:$0xff] %v117
    // Predicated region
    $region22: #{tpu_custom_call.1} parent=1 // pred_check
      %p119 = pneg %p52
    $region23: #{tpu_custom_call.1} parent=1 // pred_check_branch
      %121 = sbr.rel (%p119) target = $region25
    $region24: #{tpu_custom_call.1} parent=1 // pred_region
      %v122 = vld [vmem:[#allocation2] sm:$0xff]
      %123 = vadd.xlane.f32.xlu0 %v122
      %v124 = vpop.xlane.xlu0 %123
      %v125 = vrot.slane %v124, 4
      %v126 = vadd.f32 %v124, %v125
      %v127 = vrot.slane %v126, 2
      %v128 = vadd.f32 %v126, %v127
      %v129 = vrot.slane %v128, 1
      %v130 = vadd.f32 %v128, %v129
      %s131 = vtos %v130
      %s132 = ssub.f32 0.0, %s131
      %s133 = scalar_lea.smem [#allocation8], 0
      %134 = sst [smem:[%s133]] %s132
    $region25: #{tpu_custom_call.1} parent=1 // pred_fallthru
      _
    // Predicated region
    $region26: #{tpu_custom_call.1} parent=1 // pred_check
      _
    $region27: #{tpu_custom_call.1} parent=1 // pred_check_branch
      %136 = sbr.rel (0) target = $region29
    $region28: #{tpu_custom_call.1} parent=1 // pred_region
      %s138 = ssub.s32 16, 16
      %139 = vsyncadd [#allocation5], %s138
      %142 = dma.smem_to_hbm [#allocation8], 16, %s2, [#allocation5]
    $region29: #{tpu_custom_call.1} parent=1 // pred_fallthru
      _
    // Predicated region
    $region30: #{tpu_custom_call.1} parent=1 // pred_check
      _
    $region31: #{tpu_custom_call.1} parent=1 // pred_check_branch
      %144 = sbr.rel (0) target = $region33
    $region32: #{tpu_custom_call.1} parent=1 // pred_region
      %145 = dma.done [#allocation5], 16
    $region33: #{tpu_custom_call.1} parent=1 // pred_fallthru
      _
    %146 = sfence
    %147 = vsyncpa [#allocation4], 1
    %148 = vsyncpa [#allocation7], 1
    %149 = vsyncpa [#allocation5], 1

</llo_original>
